<compile_context>
chip_gen: v6e
topology: v6e:2x2x1
jax: 0.10.0
libtpu: 0.0.40
codegen_flags: <defaults>
</compile_context>

<pallas_src>
import functools

import jax
import jax.numpy as jnp
from jax import lax
from jax.experimental import pallas as pl
from jax.experimental.pallas import tpu as pltpu


def _round_up(v, m):
    return (v + m - 1) // m * m


def _hardswish(x):
    # PyTorch nn.Hardswish: x * clamp(x + 3, 0, 6) / 6
    return x * jnp.clip(x + 3.0, 0.0, 6.0) * (1.0 / 6.0)


# --------------------------------------------------------------------------
# Kernel 1: y = (hardswish?)(x) @ W^T   +  per-feature sum / sum-of-squares
# grid = (grid_n "parallel", grid_m "arbitrary"); the (1, tn) stat blocks stay
# resident across the inner row axis (accumulator pattern).
# --------------------------------------------------------------------------
def _linear_stats_kernel(x_ref, w_ref, y_ref, sum_ref, sq_ref, *, apply_hardswish):
    i = pl.program_id(1)  # row-tile index (inner, sequential)

    x = x_ref[...]
    if apply_hardswish:
        x = _hardswish(x)

    # x:(tm,C)  w:(tn,C)  ->  (tm,tn); contract C with C directly on the MXU
    # (avoids a host-side weight.T materialization).
    y = lax.dot_general(
        x, w_ref[...],
        dimension_numbers=(((1,), (1,)), ((), ())),
        preferred_element_type=jnp.float32)
    y_ref[...] = y.astype(y_ref.dtype)

    @pl.when(i == 0)
    def _():
        sum_ref[...] = jnp.zeros_like(sum_ref)
        sq_ref[...] = jnp.zeros_like(sq_ref)

    # Zero-padded rows contribute 0 to both sums, so padding never pollutes
    # the batch statistics (we divide by the true row count outside).
    sum_ref[...] += jnp.sum(y, axis=0, keepdims=True)
    sq_ref[...] += jnp.sum(y * y, axis=0, keepdims=True)


# --------------------------------------------------------------------------
# Kernel 2: elementwise BatchNorm apply, in-place (y buffer aliased to output)
# --------------------------------------------------------------------------
def _bn_apply_kernel(y_ref, scale_ref, shift_ref, o_ref):
    o_ref[...] = (y_ref[...] * scale_ref[...] + shift_ref[...]).astype(o_ref.dtype)


# --------------------------------------------------------------------------
# Kernel 3: plain matmul + bias (used for the 2x2/stride-2 conv via im2col)
# --------------------------------------------------------------------------
def _matmul_bias_kernel(x_ref, w_ref, b_ref, o_ref):
    y = lax.dot_general(
        x_ref[...], w_ref[...],
        dimension_numbers=(((1,), (1,)), ((), ())),
        preferred_element_type=jnp.float32)
    o_ref[...] = (y + b_ref[...]).astype(o_ref.dtype)


# --------------------------------------------------------------------------
# LinearNorm = nn.Linear(bias=False) + nn.BatchNorm1d (training-mode stats)
# --------------------------------------------------------------------------
def linear_norm(x, weight, gamma, beta, *, eps=1e-5, apply_hardswish=False,
                tm=256, tn=512):
    """x: (B,N,C) or (M,C); weight: (OUT,C); gamma/beta: (OUT,). Returns f32."""
    orig_shape = x.shape
    x2 = x.reshape(-1, orig_shape[-1]) if x.ndim == 3 else x
    M, C = x2.shape
    OUT = weight.shape[0]

    # Lane-dense output: pad OUT to a multiple of 128 (unmasked vst, full MXU tiles).
    OUT_p = _round_up(OUT, 128)
    # Row tiling: big tiles (multiple of 8), pad rows with zeros.
    tm_eff = min(tm, _round_up(M, 8))
    M_p = _round_up(M, tm_eff)
    # Column tiling: tn divides OUT_p (OUT_p is a multiple of 128).
    tn_eff = min(tn, OUT_p)
    while OUT_p % tn_eff:
        tn_eff -= 128
    grid_m, grid_n = M_p // tm_eff, OUT_p // tn_eff

    xp = x2 if M_p == M else jnp.pad(x2, ((0, M_p - M), (0, 0)))
    wp = weight if OUT_p == OUT else jnp.pad(weight, ((0, OUT_p - OUT), (0, 0)))
    gp = gamma if OUT_p == OUT else jnp.pad(gamma, (0, OUT_p - OUT))
    bp = beta if OUT_p == OUT else jnp.pad(beta, (0, OUT_p - OUT))

    # Explicit VMEM budget (double-buffered x/w/y + stat blocks), headroom added.
    vmem_need = 8 * (tm_eff * C + tn_eff * C + tm_eff * tn_eff + 2 * tn_eff)
    vmem_limit = int(max(32 * 1024 * 1024, vmem_need + (4 << 20)))

    kernel = functools.partial(_linear_stats_kernel, apply_hardswish=apply_hardswish)

    # ---- pass 1: matmul + per-feature sum / sumsq -------------------------
    y, fsum, fsq = pl.pallas_call(
        kernel,
        out_shape=(
            jax.ShapeDtypeStruct((M_p, OUT_p), jnp.float32),
            jax.ShapeDtypeStruct((1, OUT_p), jnp.float32),
            jax.ShapeDtypeStruct((1, OUT_p), jnp.float32),
        ),
        grid_spec=pltpu.PrefetchScalarGridSpec(
            num_scalar_prefetch=0,
            grid=(grid_n, grid_m),                       # rows (reduction) innermost
            in_specs=[
                pl.BlockSpec((tm_eff, C), lambda j, i: (i, 0)),
                pl.BlockSpec((tn_eff, C), lambda j, i: (j, 0)),
            ],
            out_specs=[
                pl.BlockSpec((tm_eff, tn_eff), lambda j, i: (i, j)),
                pl.BlockSpec((1, tn_eff), lambda j, i: (0, j)),
                pl.BlockSpec((1, tn_eff), lambda j, i: (0, j)),
            ],
        ),
        compiler_params=pltpu.CompilerParams(
            dimension_semantics=("parallel", "arbitrary"),
            vmem_limit_bytes=vmem_limit,
        ),
    )(xp, wp)

    # ---- tiny glue: batch stats -> affine scale/shift ----------------------
    mean = fsum / M                         # divide by TRUE row count
    var = fsq / M - mean * mean             # biased variance (PyTorch BN training)
    inv_std = lax.rsqrt(var + eps)
    scale = gp[None, :] * inv_std           # (1, OUT_p)
    shift = bp[None, :] - mean * scale      # (1, OUT_p)

    # ---- pass 2: in-place normalization (y aliased to output) --------------
    out = pl.pallas_call(
        _bn_apply_kernel,
        out_shape=jax.ShapeDtypeStruct((M_p, OUT_p), jnp.float32),
        grid_spec=pltpu.PrefetchScalarGridSpec(
            num_scalar_prefetch=0,
            grid=(grid_m, grid_n),
            in_specs=[
                pl.BlockSpec((tm_eff, tn_eff), lambda i, j: (i, j)),
                pl.BlockSpec((1, tn_eff), lambda i, j: (0, j)),
                pl.BlockSpec((1, tn_eff), lambda i, j: (0, j)),
            ],
            out_specs=pl.BlockSpec((tm_eff, tn_eff), lambda i, j: (i, j)),
        ),
        compiler_params=pltpu.CompilerParams(
            dimension_semantics=("parallel", "parallel"),
            vmem_limit_bytes=vmem_limit,
        ),
        input_output_aliases={0: 0},
    )(y, scale, shift)

    out = out[:M, :OUT]
    if len(orig_shape) == 3:
        out = out.reshape(orig_shape[0], orig_shape[1], OUT)
    return out


# --------------------------------------------------------------------------
# Matmul + bias wrapper (conv-as-im2col), lane-dense padded OUT, big row tiles.
# --------------------------------------------------------------------------
def matmul_bias(x, weight, bias, *, tm=256, tn=512):
    M, K = x.shape
    OUT = weight.shape[0]
    OUT_p = _round_up(OUT, 128)
    tm_eff = min(tm, _round_up(M, 8))
    M_p = _round_up(M, tm_eff)
    tn_eff = min(tn, OUT_p)
    while OUT_p % tn_eff:
        tn_eff -= 128
    grid_m, grid_n = M_p // tm_eff, OUT_p // tn_eff

    xp = x if M_p == M else jnp.pad(x, ((0, M_p - M), (0, 0)))
    wp = weight if OUT_p == OUT else jnp.pad(weight, ((0, OUT_p - OUT), (0, 0)))
    b2 = (bias if OUT_p == OUT else jnp.pad(bias, (0, OUT_p - OUT))).reshape(1, OUT_p)

    out = pl.pallas_call(
        _matmul_bias_kernel,
        out_shape=jax.ShapeDtypeStruct((M_p, OUT_p), jnp.float32),
        grid_spec=pltpu.PrefetchScalarGridSpec(
            num_scalar_prefetch=0,
            grid=(grid_m, grid_n),
            in_specs=[
                pl.BlockSpec((tm_eff, K), lambda i, j: (i, 0)),
                pl.BlockSpec((tn_eff, K), lambda i, j: (j, 0)),
                pl.BlockSpec((1, tn_eff), lambda i, j: (0, j)),
            ],
            out_specs=pl.BlockSpec((tm_eff, tn_eff), lambda i, j: (i, j)),
        ),
        compiler_params=pltpu.CompilerParams(
            dimension_semantics=("parallel", "parallel"),
        ),
    )(xp, wp, b2)
    return out[:M, :OUT]


# --------------------------------------------------------------------------
# AttentionDownsample forward
# --------------------------------------------------------------------------
def attention_downsample(x, p):
    B, N, C = x.shape
    H = W = int(round(N ** 0.5))
    assert H * W == N and H % 2 == 0
    Hh, Wh = H // 2, W // 2

    x4 = x.reshape(B, C, H, W)                       # raw view, mirrors PyTorch reshape

    # kv branch: computed by the PyTorch module but unused in its returned value
    # (dead code in forward; XLA will DCE it under jit).
    kv_in = x4.reshape(B, C, H * W).transpose(0, 2, 1)
    _kv = linear_norm(kv_in, p["kv_w"], p["kv_gamma"], p["kv_beta"])  # noqa: F841

    # q branch: Conv2d(C, C, kernel=2, stride=2) + bias, done as im2col + matmul.
    patches = (x4.reshape(B, C, Hh, 2, Wh, 2)
                 .transpose(0, 2, 4, 1, 3, 5)
                 .reshape(B * Hh * Wh, C * 4))                # (M, C*2*2), order (ci,kh,kw)
    wc = p["conv_w"].reshape(C, C * 4)                        # (C_out, C_in*2*2)
    q = matmul_bias(patches, wc, p["conv_b"])                 # (B*Hh*Wh, C) == (B,Hh,Wh,C)
    q_chw = q.reshape(B, Hh, Wh, C).transpose(0, 3, 1, 2)     # conv output (B,C,Hh,Wh)
    q = q_chw.reshape(B, Hh * Wh, C)                          # Flatten + reshape(B,-1,C), as PyTorch

    # proj: Hardswish fused into the LinearNorm matmul kernel.
    return linear_norm(q, p["proj_w"], p["proj_gamma"], p["proj_beta"],
                       apply_hardswish=True)


attention_downsample_jit = jax.jit(attention_downsample)


# --------------------------------------------------------------------------
# Pure-JAX references (full precision)
# --------------------------------------------------------------------------
def linear_norm_ref(x, weight, gamma, beta, eps=1e-5):
    shape = x.shape
    x2 = x.reshape(-1, shape[-1]) if x.ndim == 3 else x
    y = jnp.matmul(x2, weight.T, precision=lax.Precision.HIGHEST)
    mean = jnp.mean(y, axis=0, keepdims=True)
    var = jnp.mean((y - mean) ** 2, axis=0, keepdims=True)
    y = (y - mean) * lax.rsqrt(var + eps) * gamma[None, :] + beta[None, :]
    if len(shape) == 3:
        y = y.reshape(shape[0], shape[1], -1)
    return y


def attention_downsample_ref(x, p):
    B, N, C = x.shape
    H = W = int(round(N ** 0.5))
    x4 = x.reshape(B, C, H, W)
    conv = lax.conv_general_dilated(
        x4, p["conv_w"], window_strides=(2, 2), padding="VALID",
        dimension_numbers=("NCHW", "OIHW", "NCHW"),
        precision=lax.Precision.HIGHEST) + p["conv_b"][None, :, None, None]
    q = conv.reshape(B, -1).reshape(B, -1, C)
    return linear_norm_ref(_hardswish(q), p["proj_w"], p["proj_gamma"], p["proj_beta"])


if __name__ == "__main__":
    key = jax.random.PRNGKey(0)
    k = jax.random.split(key, 7)

    B, N, C = 2, 64, 32                     # N = 64 -> H = W = 8
    num_heads, attn_ratio, out_dim = 4, 2, 64
    inner_dim = C * attn_ratio * num_heads  # 256

    x = jax.random.normal(k[0], (B, N, C), dtype=jnp.float32)

    def _w(kk, shape, fan_in):
        return (jax.random.uniform(kk, shape, dtype=jnp.float32) - 0.5) * (2.0 / fan_in ** 0.5)

    params = {
        "kv_w": _w(k[1], (inner_dim, C), C),
        "kv_gamma": 1.0 + 0.1 * jax.random.normal(k[2], (inner_dim,), dtype=jnp.float32),
        "kv_beta": 0.1 * jax.random.normal(k[3], (inner_dim,), dtype=jnp.float32),
        "conv_w": _w(k[4], (C, C, 2, 2), C * 4),
        "conv_b": 0.1 * jax.random.normal(k[5], (C,), dtype=jnp.float32),
        "proj_w": _w(k[6], (out_dim, C), C),
        "proj_gamma": jnp.full((out_dim,), 1.2, jnp.float32),
        "proj_beta": jnp.full((out_dim,), 0.05, jnp.float32),
    }

    # Full AttentionDownsample forward.
    out = jax.block_until_ready(attention_downsample_jit(x, params))
    ref = attention_downsample_ref(x, params)
    assert out.shape == (B, N // 4, out_dim), out.shape
    err = float(jnp.max(jnp.abs(out - ref)))
    assert err < 5e-3, f"attention_downsample mismatch: max abs err {err}"

    # Standalone LinearNorm (kv branch shapes) to exercise that kernel too.
    kv_in = x.reshape(B, C, N).transpose(0, 2, 1)
    kv = jax.block_until_ready(
        linear_norm(kv_in, params["kv_w"], params["kv_gamma"], params["kv_beta"]))
    kv_ref = linear_norm_ref(kv_in, params["kv_w"], params["kv_gamma"], params["kv_beta"])
    err_kv = float(jnp.max(jnp.abs(kv - kv_ref)))
    assert kv.shape == (B, N, inner_dim)
    assert err_kv < 5e-3, f"linear_norm mismatch: max abs err {err_kv}"

    print("KERNEL_OK")
</pallas_src>

<mosaic_0001>
module attributes {stable_mosaic.version = 11 : i64} {
  func.func @_matmul_bias_kernel(%arg0: i32, %arg1: i32, %arg2: memref<32x128xf32, #tpu.memory_space<vmem>>, %arg3: memref<128x128xf32, #tpu.memory_space<vmem>>, %arg4: memref<1x128xf32, #tpu.memory_space<vmem>>, %arg5: memref<32x128xf32, #tpu.memory_space<vmem>>) attributes {dimension_semantics = [#tpu.dimension_semantics<parallel>, #tpu.dimension_semantics<parallel>], iteration_bounds = array<i64: 1, 1>, scalar_prefetch = 0 : i64, scratch_operands = 0 : i64, tpu.core_type = #tpu.core_type<tc>, window_params = [{transform_indices = @transform_0, window_bounds = array<i64: 32, 128>}, {transform_indices = @transform_1, window_bounds = array<i64: 128, 128>}, {transform_indices = @transform_2, window_bounds = array<i64: 1, 128>}, {transform_indices = @transform_3, window_bounds = array<i64: 32, 128>}]} {
    %c0 = arith.constant 0 : index
    %c0_0 = arith.constant 0 : index
    %0 = vector.load %arg2[%c0, %c0_0] : memref<32x128xf32, #tpu.memory_space<vmem>>, vector<32x128xf32>
    %c0_1 = arith.constant 0 : index
    %c0_2 = arith.constant 0 : index
    %1 = vector.load %arg3[%c0_1, %c0_2] : memref<128x128xf32, #tpu.memory_space<vmem>>, vector<128x128xf32>
    %cst = arith.constant dense<0.000000e+00> : vector<32x128xf32>
    %2 = tpu.matmul %0, %1, %cst {dimension_numbers = #tpu.dot_dimension_numbers<[1], [1], [0], [0], [0, 0, 1, 0], [], []>} : vector<32x128xf32>, vector<128x128xf32>, vector<32x128xf32> -> vector<32x128xf32>
    %c0_3 = arith.constant 0 : index
    %c0_4 = arith.constant 0 : index
    %3 = vector.load %arg4[%c0_3, %c0_4] : memref<1x128xf32, #tpu.memory_space<vmem>>, vector<1x128xf32>
    %4 = vector.broadcast %3 : vector<1x128xf32> to vector<32x128xf32>
    %5 = arith.addf %2, %4 : vector<32x128xf32>
    %c0_5 = arith.constant 0 : index
    %c0_6 = arith.constant 0 : index
    %6 = vector.load %arg5[%c0_5, %c0_6] : memref<32x128xf32, #tpu.memory_space<vmem>>, vector<32x128xf32>
    tpu.vector_store %arg5[%c0_5, %c0_6], %5 {strides = array<i32>} : memref<32x128xf32, #tpu.memory_space<vmem>>, vector<32x128xf32>,
    return
  }
  func.func @transform_0(%arg0: i32, %arg1: i32) -> (i32, i32) {
    %c0_i32 = arith.constant 0 : i32
    %c0_i32_0 = arith.constant 0 : i32
    return %arg0, %c0_i32 : i32, i32
  }
  func.func @transform_1(%arg0: i32, %arg1: i32) -> (i32, i32) {
    %c0_i32 = arith.constant 0 : i32
    %c0_i32_0 = arith.constant 0 : i32
    return %arg1, %c0_i32 : i32, i32
  }
  func.func @transform_2(%arg0: i32, %arg1: i32) -> (i32, i32) {
    %c0_i32 = arith.constant 0 : i32
    %c0_i32_0 = arith.constant 0 : i32
    return %c0_i32, %arg1 : i32, i32
  }
  func.func @transform_3(%arg0: i32, %arg1: i32) -> (i32, i32) {
    %c0_i32 = arith.constant 0 : i32
    return %arg0, %arg1 : i32, i32
  }
}

module attributes {stable_mosaic.version = 11 : i64} {
  func.func @_linear_stats_kernel(%arg0: i32, %arg1: i32, %arg2: memref<32x32xf32, #tpu.memory_space<vmem>>, %arg3: memref<128x32xf32, #tpu.memory_space<vmem>>, %arg4: memref<32x128xf32, #tpu.memory_space<vmem>>, %arg5: memref<1x128xf32, #tpu.memory_space<vmem>>, %arg6: memref<1x128xf32, #tpu.memory_space<vmem>>) attributes {dimension_semantics = [#tpu.dimension_semantics<parallel>, #tpu.dimension_semantics<arbitrary>], iteration_bounds = array<i64: 1, 1>, scalar_prefetch = 0 : i64, scratch_operands = 0 : i64, tpu.core_type = #tpu.core_type<tc>, window_params = [{transform_indices = @transform_0, window_bounds = array<i64: 32, 32>}, {transform_indices = @transform_1, window_bounds = array<i64: 128, 32>}, {transform_indices = @transform_2, window_bounds = array<i64: 32, 128>}, {transform_indices = @transform_3, window_bounds = array<i64: 1, 128>}, {transform_indices = @transform_4, window_bounds = array<i64: 1, 128>}]} {
    %c0 = arith.constant 0 : index
    %c0_0 = arith.constant 0 : index
    %0 = vector.load %arg2[%c0, %c0_0] : memref<32x32xf32, #tpu.memory_space<vmem>>, vector<32x32xf32>
    %cst = arith.constant 3.000000e+00 : f32
    %1 = vector.broadcast %cst : f32 to vector<32x32xf32>
    %2 = arith.addf %0, %1 : vector<32x32xf32>
    %cst_1 = arith.constant 0.000000e+00 : f32
    %cst_2 = arith.constant 6.000000e+00 : f32
    %3 = vector.broadcast %cst_1 : f32 to vector<32x32xf32>
    %4 = arith.maximumf %3, %2 : vector<32x32xf32>
    %5 = vector.broadcast %cst_2 : f32 to vector<32x32xf32>
    %6 = arith.minimumf %5, %4 : vector<32x32xf32>
    %7 = arith.mulf %0, %6 : vector<32x32xf32>
    %cst_3 = arith.constant 0.166666672 : f32
    %8 = vector.broadcast %cst_3 : f32 to vector<32x32xf32>
    %9 = arith.mulf %7, %8 : vector<32x32xf32>
    %c0_4 = arith.constant 0 : index
    %c0_5 = arith.constant 0 : index
    %10 = vector.load %arg3[%c0_4, %c0_5] : memref<128x32xf32, #tpu.memory_space<vmem>>, vector<128x32xf32>
    %cst_6 = arith.constant dense<0.000000e+00> : vector<32x128xf32>
    %11 = tpu.matmul %9, %10, %cst_6 {dimension_numbers = #tpu.dot_dimension_numbers<[1], [1], [0], [0], [0, 0, 1, 0], [], []>} : vector<32x32xf32>, vector<128x32xf32>, vector<32x128xf32> -> vector<32x128xf32>
    %c0_7 = arith.constant 0 : index
    %c0_8 = arith.constant 0 : index
    %12 = vector.load %arg4[%c0_7, %c0_8] : memref<32x128xf32, #tpu.memory_space<vmem>>, vector<32x128xf32>
    tpu.vector_store %arg4[%c0_7, %c0_8], %11 {strides = array<i32>} : memref<32x128xf32, #tpu.memory_space<vmem>>, vector<32x128xf32>,
    %c0_i32 = arith.constant 0 : i32
    %13 = arith.cmpi eq, %arg1, %c0_i32 : i32
    %14 = arith.extui %13 : i1 to i32
    %c0_i32_9 = arith.constant 0 : i32
    %15 = arith.cmpi ne, %14, %c0_i32_9 : i32
    scf.if %15 {
      %cst_20 = arith.constant 0.000000e+00 : f32
      %27 = vector.broadcast %cst_20 : f32 to vector<1x128xf32>
      %c0_21 = arith.constant 0 : index
      %c0_22 = arith.constant 0 : index
      %28 = vector.load %arg5[%c0_21, %c0_22] : memref<1x128xf32, #tpu.memory_space<vmem>>, vector<1x128xf32>
      tpu.vector_store %arg5[%c0_21, %c0_22], %27 {strides = array<i32>} : memref<1x128xf32, #tpu.memory_space<vmem>>, vector<1x128xf32>,
      %cst_23 = arith.constant 0.000000e+00 : f32
      %29 = vector.broadcast %cst_23 : f32 to vector<1x128xf32>
      %c0_24 = arith.constant 0 : index
      %c0_25 = arith.constant 0 : index
      %30 = vector.load %arg6[%c0_24, %c0_25] : memref<1x128xf32, #tpu.memory_space<vmem>>, vector<1x128xf32>
      tpu.vector_store %arg6[%c0_24, %c0_25], %29 {strides = array<i32>} : memref<1x128xf32, #tpu.memory_space<vmem>>, vector<1x128xf32>,
    } else {
    }
    %c0_10 = arith.constant 0 : index
    %c0_11 = arith.constant 0 : index
    %16 = vector.load %arg5[%c0_10, %c0_11] : memref<1x128xf32, #tpu.memory_space<vmem>>, vector<1x128xf32>
    %cst_12 = arith.constant dense<0.000000e+00> : vector<128xf32>
    %17 = vector.multi_reduction <add>, %11, %cst_12 [0] : vector<32x128xf32> to vector<128xf32>
    %18 = vector.shape_cast %17 : vector<128xf32> to vector<1x128xf32>
    %19 = arith.addf %16, %18 : vector<1x128xf32>
    %c0_13 = arith.constant 0 : index
    %c0_14 = arith.constant 0 : index
    %20 = vector.load %arg5[%c0_13, %c0_14] : memref<1x128xf32, #tpu.memory_space<vmem>>, vector<1x128xf32>
    tpu.vector_store %arg5[%c0_13, %c0_14], %19 {strides = array<i32>} : memref<1x128xf32, #tpu.memory_space<vmem>>, vector<1x128xf32>,
    %c0_15 = arith.constant 0 : index
    %c0_16 = arith.constant 0 : index
    %21 = vector.load %arg6[%c0_15, %c0_16] : memref<1x128xf32, #tpu.memory_space<vmem>>, vector<1x128xf32>
    %22 = arith.mulf %11, %11 : vector<32x128xf32>
    %cst_17 = arith.constant dense<0.000000e+00> : vector<128xf32>
    %23 = vector.multi_reduction <add>, %22, %cst_17 [0] : vector<32x128xf32> to vector<128xf32>
    %24 = vector.shape_cast %23 : vector<128xf32> to vector<1x128xf32>
    %25 = arith.addf %21, %24 : vector<1x128xf32>
    %c0_18 = arith.constant 0 : index
    %c0_19 = arith.constant 0 : index
    %26 = vector.load %arg6[%c0_18, %c0_19] : memref<1x128xf32, #tpu.memory_space<vmem>>, vector<1x128xf32>
    tpu.vector_store %arg6[%c0_18, %c0_19], %25 {strides = array<i32>} : memref<1x128xf32, #tpu.memory_space<vmem>>, vector<1x128xf32>,
    return
  }
  func.func @transform_0(%arg0: i32, %arg1: i32) -> (i32, i32) {
    %c0_i32 = arith.constant 0 : i32
    %c0_i32_0 = arith.constant 0 : i32
    return %arg1, %c0_i32 : i32, i32
  }
  func.func @transform_1(%arg0: i32, %arg1: i32) -> (i32, i32) {
    %c0_i32 = arith.constant 0 : i32
    %c0_i32_0 = arith.constant 0 : i32
    return %arg0, %c0_i32 : i32, i32
  }
  func.func @transform_2(%arg0: i32, %arg1: i32) -> (i32, i32) {
    %c0_i32 = arith.constant 0 : i32
    return %arg1, %arg0 : i32, i32
  }
  func.func @transform_3(%arg0: i32, %arg1: i32) -> (i32, i32) {
    %c0_i32 = arith.constant 0 : i32
    %c0_i32_0 = arith.constant 0 : i32
    return %c0_i32, %arg0 : i32, i32
  }
  func.func @transform_4(%arg0: i32, %arg1: i32) -> (i32, i32) {
    %c0_i32 = arith.constant 0 : i32
    %c0_i32_0 = arith.constant 0 : i32
    return %c0_i32, %arg0 : i32, i32
  }
}

module attributes {stable_mosaic.version = 11 : i64} {
  func.func @_bn_apply_kernel(%arg0: i32, %arg1: i32, %arg2: memref<32x128xf32, #tpu.memory_space<vmem>>, %arg3: memref<1x128xf32, #tpu.memory_space<vmem>>, %arg4: memref<1x128xf32, #tpu.memory_space<vmem>>, %arg5: memref<32x128xf32, #tpu.memory_space<vmem>>) attributes {dimension_semantics = [#tpu.dimension_semantics<parallel>, #tpu.dimension_semantics<parallel>], iteration_bounds = array<i64: 1, 1>, scalar_prefetch = 0 : i64, scratch_operands = 0 : i64, tpu.core_type = #tpu.core_type<tc>, window_params = [{transform_indices = @transform_0, window_bounds = array<i64: 32, 128>}, {transform_indices = @transform_1, window_bounds = array<i64: 1, 128>}, {transform_indices = @transform_2, window_bounds = array<i64: 1, 128>}, {transform_indices = @transform_3, window_bounds = array<i64: 32, 128>}]} {
    %c0 = arith.constant 0 : index
    %c0_0 = arith.constant 0 : index
    %0 = vector.load %arg2[%c0, %c0_0] : memref<32x128xf32, #tpu.memory_space<vmem>>, vector<32x128xf32>
    %c0_1 = arith.constant 0 : index
    %c0_2 = arith.constant 0 : index
    %1 = vector.load %arg3[%c0_1, %c0_2] : memref<1x128xf32, #tpu.memory_space<vmem>>, vector<1x128xf32>
    %2 = vector.broadcast %1 : vector<1x128xf32> to vector<32x128xf32>
    %3 = arith.mulf %0, %2 : vector<32x128xf32>
    %c0_3 = arith.constant 0 : index
    %c0_4 = arith.constant 0 : index
    %4 = vector.load %arg4[%c0_3, %c0_4] : memref<1x128xf32, #tpu.memory_space<vmem>>, vector<1x128xf32>
    %5 = vector.broadcast %4 : vector<1x128xf32> to vector<32x128xf32>
    %6 = arith.addf %3, %5 : vector<32x128xf32>
    %c0_5 = arith.constant 0 : index
    %c0_6 = arith.constant 0 : index
    %7 = vector.load %arg5[%c0_5, %c0_6] : memref<32x128xf32, #tpu.memory_space<vmem>>, vector<32x128xf32>
    tpu.vector_store %arg5[%c0_5, %c0_6], %6 {strides = array<i32>} : memref<32x128xf32, #tpu.memory_space<vmem>>, vector<32x128xf32>,
    return
  }
  func.func @transform_0(%arg0: i32, %arg1: i32) -> (i32, i32) {
    %c0_i32 = arith.constant 0 : i32
    return %arg0, %arg1 : i32, i32
  }
  func.func @transform_1(%arg0: i32, %arg1: i32) -> (i32, i32) {
    %c0_i32 = arith.constant 0 : i32
    %c0_i32_0 = arith.constant 0 : i32
    return %c0_i32, %arg1 : i32, i32
  }
  func.func @transform_2(%arg0: i32, %arg1: i32) -> (i32, i32) {
    %c0_i32 = arith.constant 0 : i32
    %c0_i32_0 = arith.constant 0 : i32
    return %c0_i32, %arg1 : i32, i32
  }
  func.func @transform_3(%arg0: i32, %arg1: i32) -> (i32, i32) {
    %c0_i32 = arith.constant 0 : i32
    return %arg0, %arg1 : i32, i32
  }
}

</mosaic_0001>

<llo_original>
// kernel: attention_downsample.3
$region0: #{attention_downsample.3}
  #allocation0 [shape = 'u32[]', space=smem, size = 0x4, offset = 0x4, fixed_abs, tag = 'smem constant byte address 0x4 - core index']
  #allocation1 [shape = 'u32[144,128]{1,0:T(1,128)}', space=vmem, size = 0x12000, scoped, tag = 'internal scratch']
  %s0 = inlined_call_operand.vmem [shape: f32[32,128], index: 0, kind: input, shape index: {}]
  %s1 = inlined_call_operand.vmem [shape: f32[128,128], index: 1, kind: input, shape index: {}]
  %s2 = inlined_call_operand.vmem [shape: f32[1,128], index: 2, kind: input, shape index: {}]
  %s3 = inlined_call_operand.vmem [shape: f32[32,128], index: 3, kind: output, shape index: {}]
  %s4 = sld [smem:[#allocation0]]
  $region22: #{attention_downsample.3} parent=0
    _
  %s6 = ssub.s32 1, %s4
  %s7 = scalar_select 0, %s6, %s4
  // Predicated region
  $region2: #{attention_downsample.3} parent=0 // pred_check
    _
  $region3: #{attention_downsample.3} parent=0 // pred_check_branch
    %9 = sbr.rel (0) target = $region5
  $region4: #{attention_downsample.3} parent=0 // pred_region
    _
  $region5: #{attention_downsample.3} parent=0 // pred_fallthru
    _
  // Predicated region
  $region6: #{attention_downsample.3} parent=0 // pred_check
    _
  $region7: #{attention_downsample.3} parent=0 // pred_check_branch
    %11 = sbr.rel (0) target = $region9
  $region8: #{attention_downsample.3} parent=0 // pred_region
    _
  $region9: #{attention_downsample.3} parent=0 // pred_fallthru
    _
  // Predicated region
  $region10: #{attention_downsample.3} parent=0 // pred_check
    _
  $region11: #{attention_downsample.3} parent=0 // pred_check_branch
    %13 = sbr.rel (0) target = $region13
  $region12: #{attention_downsample.3} parent=0 // pred_region
    _
  $region13: #{attention_downsample.3} parent=0 // pred_fallthru
    _
  %v14 = vld [vmem:[%s0] sm:$0xff]
  %v15 = vld [vmem:[%s0 + $0x8] sm:$0xff]
  %v16 = vld [vmem:[%s0 + $0x10] sm:$0xff]
  %v17 = vld [vmem:[%s0 + $0x18] sm:$0xff]
  %v18 = vld [vmem:[%s1] sm:$0xff]
  %v19 = vld [vmem:[%s1 + $0x8] sm:$0xff]
  %v20 = vld [vmem:[%s1 + $0x10] sm:$0xff]
  %v21 = vld [vmem:[%s1 + $0x18] sm:$0xff]
  %v22 = vld [vmem:[%s1 + $0x20] sm:$0xff]
  %v23 = vld [vmem:[%s1 + $0x28] sm:$0xff]
  %v24 = vld [vmem:[%s1 + $0x30] sm:$0xff]
  %v25 = vld [vmem:[%s1 + $0x38] sm:$0xff]
  %v26 = vld [vmem:[%s1 + $0x40] sm:$0xff]
  %v27 = vld [vmem:[%s1 + $0x48] sm:$0xff]
  %v28 = vld [vmem:[%s1 + $0x50] sm:$0xff]
  %v29 = vld [vmem:[%s1 + $0x58] sm:$0xff]
  %v30 = vld [vmem:[%s1 + $0x60] sm:$0xff]
  %v31 = vld [vmem:[%s1 + $0x68] sm:$0xff]
  %v32 = vld [vmem:[%s1 + $0x70] sm:$0xff]
  %v33 = vld [vmem:[%s1 + $0x78] sm:$0xff]
  %v34 = vld [vmem:[%s2] sm:$0x1]
  %v36 = vlaneseq
  %v37 = vshrl.u32 %v36, 7
  %v38 = vsub.s32 0, %v37
  %v39 = vrot.slane %v34, %v38
  %41 = vmatprep.subr.mxu0 0.0
  %42 = vmatpush1.xpose.msra.mxu0 %v33
  %43 = vmatprep.subr.mxu0 0.0
  %44 = vmatpush1.xpose.msra.mxu0 %v32
  %45 = vmatprep.subr.mxu0 0.0
  %46 = vmatpush1.xpose.msra.mxu0 %v31
  %47 = vmatprep.subr.mxu0 0.0
  %48 = vmatpush1.xpose.msra.mxu0 %v30
  %49 = vmatprep.subr.mxu0 0.0
  %50 = vmatpush1.xpose.msra.mxu0 %v29
  %51 = vmatprep.subr.mxu0 0.0
  %52 = vmatpush1.xpose.msra.mxu0 %v28
  %53 = vmatprep.subr.mxu0 0.0
  %54 = vmatpush1.xpose.msra.mxu0 %v27
  %55 = vmatprep.subr.mxu0 0.0
  %56 = vmatpush1.xpose.msra.mxu0 %v26
  %57 = vmatprep.subr.mxu0 0.0
  %58 = vmatpush1.xpose.msra.mxu0 %v25
  %59 = vmatprep.subr.mxu0 0.0
  %60 = vmatpush1.xpose.msra.mxu0 %v24
  %61 = vmatprep.subr.mxu0 0.0
  %62 = vmatpush1.xpose.msra.mxu0 %v23
  %63 = vmatprep.subr.mxu0 0.0
  %64 = vmatpush1.xpose.msra.mxu0 %v22
  %65 = vmatprep.subr.mxu0 0.0
  %66 = vmatpush1.xpose.msra.mxu0 %v21
  %67 = vmatprep.subr.mxu0 0.0
  %68 = vmatpush1.xpose.msra.mxu0 %v20
  %69 = vmatprep.subr.mxu0 0.0
  %70 = vmatpush1.xpose.msra.mxu0 %v19
  %71 = vmatprep.subr.mxu0 0.0
  %72 = vmatpush1.xpose.msra.mxu0 %v18
  %73 = vmatprep.subr.mxu0 0.0
  %74 = vmatpush2.xpose.msra.mxu0 0.0
  %75 = vmatprep.subr.mxu0 0.0
  %76 = vmatpush2.xpose.msra.mxu0 0.0
  %77 = vmatprep.subr.mxu0 0.0
  %78 = vmatpush2.xpose.msra.mxu0 0.0
  %79 = vmatprep.subr.mxu0 0.0
  %80 = vmatpush2.xpose.msra.mxu0 0.0
  %81 = vmatprep.subr.mxu0 0.0
  %82 = vmatpush2.xpose.msra.mxu0 0.0
  %83 = vmatprep.subr.mxu0 0.0
  %84 = vmatpush2.xpose.msra.mxu0 0.0
  %85 = vmatprep.subr.mxu0 0.0
  %86 = vmatpush2.xpose.msra.mxu0 0.0
  %87 = vmatprep.subr.mxu0 0.0
  %88 = vmatpush2.xpose.msra.mxu0 0.0
  %89 = vmatprep.subr.mxu0 0.0
  %90 = vmatpush2.xpose.msra.mxu0 0.0
  %91 = vmatprep.subr.mxu0 0.0
  %92 = vmatpush2.xpose.msra.mxu0 0.0
  %93 = vmatprep.subr.mxu0 0.0
  %94 = vmatpush2.xpose.msra.mxu0 0.0
  %95 = vmatprep.subr.mxu0 0.0
  %96 = vmatpush2.xpose.msra.mxu0 0.0
  %97 = vmatprep.subr.mxu0 0.0
  %98 = vmatpush2.xpose.msra.mxu0 0.0
  %99 = vmatprep.subr.mxu0 0.0
  %100 = vmatpush2.xpose.msra.mxu0 0.0
  %101 = vmatprep.subr.mxu0 0.0
  %102 = vmatpush2.xpose.msra.mxu0 0.0
  %103 = vmatprep.subr.mxu0 0.0
  %104 = vmatpush2.xpose.msra.mxu0 0.0
  %105 = vmatprep.mubr.f32.mxu0 0.0
  %106 = vmatmul.mubr.f32.gmra.mxu0 %v14
  %v107 = vpop.f32.mrf.mxu0
  %v108 = vadd.f32 %v39, %v107
  %v109 = vpop.f32.mrf.mxu0
  %110 = vmatprep.mubr.f32.mxu0 0.0
  %111 = vmatmul.mubr.f32.gmra.mxu0 %v15
  %v112 = vpop.f32.mrf.mxu0
  %v113 = vadd.f32 %v39, %v112
  %v114 = vpop.f32.mrf.mxu0
  %115 = vmatprep.mubr.f32.mxu0 0.0
  %116 = vmatmul.mubr.f32.gmra.mxu0 %v16
  %v117 = vpop.f32.mrf.mxu0
  %v118 = vadd.f32 %v39, %v117
  %v119 = vpop.f32.mrf.mxu0
  %120 = vmatprep.mubr.f32.mxu0 0.0
  %121 = vmatmul.mubr.f32.gmra.mxu0 %v17
  %v122 = vpop.f32.mrf.mxu0
  %v123 = vadd.f32 %v39, %v122
  %v124 = vpop.f32.mrf.mxu0
  %125 = vdwg.mxu0
  %126 = vst [vmem:[%s3] sm:$0xff] %v108
  %127 = vst [vmem:[%s3 + $0x8] sm:$0xff] %v113
  %128 = vst [vmem:[%s3 + $0x10] sm:$0xff] %v118
  %129 = vst [vmem:[%s3 + $0x18] sm:$0xff] %v123
  // Predicated region
  $region14: #{attention_downsample.3} parent=0 // pred_check
    _
  $region15: #{attention_downsample.3} parent=0 // pred_check_branch
    %131 = sbr.rel (0) target = $region17
  $region16: #{attention_downsample.3} parent=0 // pred_region
    _
  $region17: #{attention_downsample.3} parent=0 // pred_fallthru
    _
  // Predicated region
  $region18: #{attention_downsample.3} parent=0 // pred_check
    _
  $region19: #{attention_downsample.3} parent=0 // pred_check_branch
    %133 = sbr.rel (0) target = $region21
  $region20: #{attention_downsample.3} parent=0 // pred_region
    _
  $region21: #{attention_downsample.3} parent=0 // pred_fallthru
    _

// kernel: attention_downsample.4
$region0: #{attention_downsample.4}
  #allocation0 [shape = 'u32[]', space=smem, size = 0x4, offset = 0x4, fixed_abs, tag = 'smem constant byte address 0x4 - core index']
  #allocation1 [shape = 'u32[144,128]{1,0:T(1,128)}', space=vmem, size = 0x12000, scoped, tag = 'internal scratch']
  %s0 = inlined_call_operand.vmem [shape: f32[32,32], index: 0, kind: input, shape index: {}]
  %s1 = inlined_call_operand.vmem [shape: f32[128,32], index: 1, kind: input, shape index: {}]
  %s2 = inlined_call_operand.vmem [shape: f32[32,128], index: 2, kind: output, shape index: {0}]
  %s3 = inlined_call_operand.vmem [shape: f32[1,128], index: 3, kind: output, shape index: {1}]
  %s4 = inlined_call_operand.vmem [shape: f32[1,128], index: 4, kind: output, shape index: {2}]
  %5 = xla_tuple %s2, %s3, %s4
  %s6 = sld [smem:[#allocation0]]
  $region38: #{attention_downsample.4} parent=0
    _
  %s8 = ssub.s32 1, %s6
  %s9 = scalar_select 0, %s8, %s6
  // Predicated region
  $region2: #{attention_downsample.4} parent=0 // pred_check
    _
  $region3: #{attention_downsample.4} parent=0 // pred_check_branch
    %11 = sbr.rel (0) target = $region5
  $region4: #{attention_downsample.4} parent=0 // pred_region
    _
  $region5: #{attention_downsample.4} parent=0 // pred_fallthru
    _
  // Predicated region
  $region6: #{attention_downsample.4} parent=0 // pred_check
    _
  $region7: #{attention_downsample.4} parent=0 // pred_check_branch
    %13 = sbr.rel (0) target = $region9
  $region8: #{attention_downsample.4} parent=0 // pred_region
    _
  $region9: #{attention_downsample.4} parent=0 // pred_fallthru
    _
  %v14 = vld [vmem:[%s0] sm:$0xff]
  %v15 = vld [vmem:[%s0 + $0x8] sm:$0xff]
  %v16 = vld [vmem:[%s0 + $0x10] sm:$0xff]
  %v17 = vld [vmem:[%s0 + $0x18] sm:$0xff]
  %v18 = vadd.f32 %v14, 3.0
  %v19 = vadd.f32 %v15, 3.0
  %v20 = vadd.f32 %v16, 3.0
  %v21 = vadd.f32 %v17, 3.0
  %v22 = vmax.f32 %v18, 0.0
  %v23 = vmax.f32 %v19, 0.0
  %v24 = vmax.f32 %v20, 0.0
  %v25 = vmax.f32 %v21, 0.0
  %v26 = vmin.f32 %v22, 6.0
  %v27 = vmin.f32 %v23, 6.0
  %v28 = vmin.f32 %v24, 6.0
  %v29 = vmin.f32 %v25, 6.0
  %v30 = vmul.f32 %v14, %v26
  %v31 = vmul.f32 %v15, %v27
  %v32 = vmul.f32 %v16, %v28
  %v33 = vmul.f32 %v17, %v29
  %v34 = vmul.f32 %v30, 0.16666667
  %v35 = vmul.f32 %v31, 0.16666667
  %v36 = vmul.f32 %v32, 0.16666667
  %v37 = vmul.f32 %v33, 0.16666667
  %v38 = vld [vmem:[%s1] sm:$0xff]
  %v39 = vld [vmem:[%s1 + $0x8] sm:$0xff]
  %v40 = vld [vmem:[%s1 + $0x10] sm:$0xff]
  %v41 = vld [vmem:[%s1 + $0x18] sm:$0xff]
  %v42 = vld [vmem:[%s1 + $0x20] sm:$0xff]
  %v43 = vld [vmem:[%s1 + $0x28] sm:$0xff]
  %v44 = vld [vmem:[%s1 + $0x30] sm:$0xff]
  %v45 = vld [vmem:[%s1 + $0x38] sm:$0xff]
  %v46 = vld [vmem:[%s1 + $0x40] sm:$0xff]
  %v47 = vld [vmem:[%s1 + $0x48] sm:$0xff]
  %v48 = vld [vmem:[%s1 + $0x50] sm:$0xff]
  %v49 = vld [vmem:[%s1 + $0x58] sm:$0xff]
  %v50 = vld [vmem:[%s1 + $0x60] sm:$0xff]
  %v51 = vld [vmem:[%s1 + $0x68] sm:$0xff]
  %v52 = vld [vmem:[%s1 + $0x70] sm:$0xff]
  %v53 = vld [vmem:[%s1 + $0x78] sm:$0xff]
  %vm54 = vcmask 261120
  %v56 = vsel %vm54, %v34, 0
  %v59 = vsel %vm54, %v35, 0
  %v62 = vsel %vm54, %v36, 0
  %v65 = vsel %vm54, %v37, 0
  %v68 = vsel %vm54, %v38, 0
  %v71 = vsel %vm54, %v39, 0
  %v74 = vsel %vm54, %v40, 0
  %v77 = vsel %vm54, %v41, 0
  %v80 = vsel %vm54, %v42, 0
  %v83 = vsel %vm54, %v43, 0
  %v86 = vsel %vm54, %v44, 0
  %v89 = vsel %vm54, %v45, 0
  %v92 = vsel %vm54, %v46, 0
  %v95 = vsel %vm54, %v47, 0
  %v98 = vsel %vm54, %v48, 0
  %v101 = vsel %vm54, %v49, 0
  %v104 = vsel %vm54, %v50, 0
  %v107 = vsel %vm54, %v51, 0
  %v110 = vsel %vm54, %v52, 0
  %v113 = vsel %vm54, %v53, 0
  %115 = vmatprep.subr.mxu0 0.0
  %116 = vmatpush1.xpose.msra.mxu0 %v113
  %117 = vmatprep.subr.mxu0 0.0
  %118 = vmatpush1.xpose.msra.mxu0 %v110
  %119 = vmatprep.subr.mxu0 0.0
  %120 = vmatpush1.xpose.msra.mxu0 %v107
  %121 = vmatprep.subr.mxu0 0.0
  %122 = vmatpush1.xpose.msra.mxu0 %v104
  %123 = vmatprep.subr.mxu0 0.0
  %124 = vmatpush1.xpose.msra.mxu0 %v101
  %125 = vmatprep.subr.mxu0 0.0
  %126 = vmatpush1.xpose.msra.mxu0 %v98
  %127 = vmatprep.subr.mxu0 0.0
  %128 = vmatpush1.xpose.msra.mxu0 %v95
  %129 = vmatprep.subr.mxu0 0.0
  %130 = vmatpush1.xpose.msra.mxu0 %v92
  %131 = vmatprep.subr.mxu0 0.0
  %132 = vmatpush1.xpose.msra.mxu0 %v89
  %133 = vmatprep.subr.mxu0 0.0
  %134 = vmatpush1.xpose.msra.mxu0 %v86
  %135 = vmatprep.subr.mxu0 0.0
  %136 = vmatpush1.xpose.msra.mxu0 %v83
  %137 = vmatprep.subr.mxu0 0.0
  %138 = vmatpush1.xpose.msra.mxu0 %v80
  %139 = vmatprep.subr.mxu0 0.0
  %140 = vmatpush1.xpose.msra.mxu0 %v77
  %141 = vmatprep.subr.mxu0 0.0
  %142 = vmatpush1.xpose.msra.mxu0 %v74
  %143 = vmatprep.subr.mxu0 0.0
  %144 = vmatpush1.xpose.msra.mxu0 %v71
  %145 = vmatprep.subr.mxu0 0.0
  %146 = vmatpush1.xpose.msra.mxu0 %v68
  %147 = vmatprep.subr.mxu0 0.0
  %148 = vmatpush2.xpose.msra.mxu0 0.0
  %149 = vmatprep.subr.mxu0 0.0
  %150 = vmatpush2.xpose.msra.mxu0 0.0
  %151 = vmatprep.subr.mxu0 0.0
  %152 = vmatpush2.xpose.msra.mxu0 0.0
  %153 = vmatprep.subr.mxu0 0.0
  %154 = vmatpush2.xpose.msra.mxu0 0.0
  %155 = vmatprep.subr.mxu0 0.0
  %156 = vmatpush2.xpose.msra.mxu0 0.0
  %157 = vmatprep.subr.mxu0 0.0
  %158 = vmatpush2.xpose.msra.mxu0 0.0
  %159 = vmatprep.subr.mxu0 0.0
  %160 = vmatpush2.xpose.msra.mxu0 0.0
  %161 = vmatprep.subr.mxu0 0.0
  %162 = vmatpush2.xpose.msra.mxu0 0.0
  %163 = vmatprep.subr.mxu0 0.0
  %164 = vmatpush2.xpose.msra.mxu0 0.0
  %165 = vmatprep.subr.mxu0 0.0
  %166 = vmatpush2.xpose.msra.mxu0 0.0
  %167 = vmatprep.subr.mxu0 0.0
  %168 = vmatpush2.xpose.msra.mxu0 0.0
  %169 = vmatprep.subr.mxu0 0.0
  %170 = vmatpush2.xpose.msra.mxu0 0.0
  %171 = vmatprep.subr.mxu0 0.0
  %172 = vmatpush2.xpose.msra.mxu0 0.0
  %173 = vmatprep.subr.mxu0 0.0
  %174 = vmatpush2.xpose.msra.mxu0 0.0
  %175 = vmatprep.subr.mxu0 0.0
  %176 = vmatpush2.xpose.msra.mxu0 0.0
  %177 = vmatprep.subr.mxu0 0.0
  %178 = vmatpush2.xpose.msra.mxu0 0.0
  %179 = vmatprep.mubr.f32.mxu0 0.0
  %180 = vmatmul.mubr.f32.gmra.mxu0 %v56
  %v181 = vpop.f32.mrf.mxu0
  %v182 = vadd.f32 0.0, %v181
  %v183 = vpop.f32.mrf.mxu0
  %184 = vmatprep.mubr.f32.mxu0 0.0
  %185 = vmatmul.mubr.f32.gmra.mxu0 %v59
  %v186 = vpop.f32.mrf.mxu0
  %v187 = vadd.f32 0.0, %v186
  %v188 = vpop.f32.mrf.mxu0
  %189 = vmatprep.mubr.f32.mxu0 0.0
  %190 = vmatmul.mubr.f32.gmra.mxu0 %v62
  %v191 = vpop.f32.mrf.mxu0
  %v192 = vadd.f32 0.0, %v191
  %v193 = vpop.f32.mrf.mxu0
  %194 = vmatprep.mubr.f32.mxu0 0.0
  %195 = vmatmul.mubr.f32.gmra.mxu0 %v65
  %v196 = vpop.f32.mrf.mxu0
  %v197 = vadd.f32 0.0, %v196
  %v198 = vpop.f32.mrf.mxu0
  %199 = vdwg.mxu0
  %200 = vst [vmem:[%s2] sm:$0xff] %v182
  %201 = vst [vmem:[%s2 + $0x8] sm:$0xff] %v187
  %202 = vst [vmem:[%s2 + $0x10] sm:$0xff] %v192
  %203 = vst [vmem:[%s2 + $0x18] sm:$0xff] %v197
  %p204 = scmp.eq.s32.totalorder 0, 0
  // Predicated region
  $region10: #{attention_downsample.4} parent=0 // pred_check
    %p205 = pneg %p204
  $region11: #{attention_downsample.4} parent=0 // pred_check_branch
    %207 = sbr.rel (%p205) target = $region13
  $region12: #{attention_downsample.4} parent=0 // pred_region
    %208 = vst [vmem:[%s3] sm:$0x1] 0.0
    %209 = vst [vmem:[%s4] sm:$0x1] 0.0
  $region13: #{attention_downsample.4} parent=0 // pred_fallthru
    _
  %v210 = vld [vmem:[%s3] sm:$0x1]
  %v211 = vadd.f32 %v182, %v187
  %v212 = vadd.f32 %v211, %v192
  %v213 = vadd.f32 %v212, %v197
  %v214 = vrot.slane %v213, 4
  %v215 = vadd.f32 %v213, %v214
  %v216 = vrot.slane %v215, 2
  %v217 = vadd.f32 %v215, %v216
  %v218 = vrot.slane %v217, 1
  %v219 = vadd.f32 %v217, %v218
  %v220 = vadd.f32 %v210, %v219
  %221 = vst [vmem:[%s3] sm:$0x1] %v220
  %v222 = vld [vmem:[%s4] sm:$0x1]
  %v223 = vmul.f32 %v182, %v182
  %v224 = vmul.f32 %v187, %v187
  %v225 = vmul.f32 %v192, %v192
  %v226 = vmul.f32 %v197, %v197
  %v227 = vadd.f32 %v223, %v224
  %v228 = vadd.f32 %v227, %v225
  %v229 = vadd.f32 %v228, %v226
  %v230 = vrot.slane %v229, 4
  %v231 = vadd.f32 %v229, %v230
  %v232 = vrot.slane %v231, 2
  %v233 = vadd.f32 %v231, %v232
  %v234 = vrot.slane %v233, 1
  %v235 = vadd.f32 %v233, %v234
  %v236 = vadd.f32 %v222, %v235
  %237 = vst [vmem:[%s4] sm:$0x1] %v236
  // Predicated region
  $region14: #{attention_downsample.4} parent=0 // pred_check
    _
  $region15: #{attention_downsample.4} parent=0 // pred_check_branch
    %239 = sbr.rel (0) target = $region17
  $region16: #{attention_downsample.4} parent=0 // pred_region
    _
  $region17: #{attention_downsample.4} parent=0 // pred_fallthru
    _
  // Predicated region
  $region18: #{attention_downsample.4} parent=0 // pred_check
    _
  $region19: #{attention_downsample.4} parent=0 // pred_check_branch
    %241 = sbr.rel (0) target = $region21
  $region20: #{attention_downsample.4} parent=0 // pred_region
    _
  $region21: #{attention_downsample.4} parent=0 // pred_fallthru
    _
  // Predicated region
  $region22: #{attention_downsample.4} parent=0 // pred_check
    _
  $region23: #{attention_downsample.4} parent=0 // pred_check_branch
    %243 = sbr.rel (0) target = $region25
  $region24: #{attention_downsample.4} parent=0 // pred_region
    _
  $region25: #{attention_downsample.4} parent=0 // pred_fallthru
    _
  // Predicated region
  $region26: #{attention_downsample.4} parent=0 // pred_check
    _
  $region27: #{attention_downsample.4} parent=0 // pred_check_branch
    %245 = sbr.rel (0) target = $region29
  $region28: #{attention_downsample.4} parent=0 // pred_region
    _
  $region29: #{attention_downsample.4} parent=0 // pred_fallthru
    _
  // Predicated region
  $region30: #{attention_downsample.4} parent=0 // pred_check
    _
  $region31: #{attention_downsample.4} parent=0 // pred_check_branch
    %247 = sbr.rel (0) target = $region33
  $region32: #{attention_downsample.4} parent=0 // pred_region
    _
  $region33: #{attention_downsample.4} parent=0 // pred_fallthru
    _
  // Predicated region
  $region34: #{attention_downsample.4} parent=0 // pred_check
    _
  $region35: #{attention_downsample.4} parent=0 // pred_check_branch
    %249 = sbr.rel (0) target = $region37
  $region36: #{attention_downsample.4} parent=0 // pred_region
    _
  $region37: #{attention_downsample.4} parent=0 // pred_fallthru
    _

// kernel: attention_downsample.5
$region0: #{attention_downsample.5}
  #allocation0 [shape = 'u32[]', space=smem, size = 0x4, offset = 0x4, fixed_abs, tag = 'smem constant byte address 0x4 - core index']
  #allocation1 [shape = 'u32[144,128]{1,0:T(1,128)}', space=vmem, size = 0x12000, scoped, tag = 'internal scratch']
  %s0 = inlined_call_operand.vmem [shape: f32[32,128], index: 0, kind: input, shape index: {}, may-alias: {0,3}]
  %s1 = inlined_call_operand.vmem [shape: f32[1,128], index: 1, kind: input, shape index: {}]
  %s2 = inlined_call_operand.vmem [shape: f32[1,128], index: 2, kind: input, shape index: {}]
  %s3 = inlined_call_operand.vmem [shape: f32[32,128], index: 3, kind: output, shape index: {}, may-alias: {0,3}]
  %s4 = sld [smem:[#allocation0]]
  $region22: #{attention_downsample.5} parent=0
    _
  %s6 = ssub.s32 1, %s4
  %s7 = scalar_select 0, %s6, %s4
  // Predicated region
  $region2: #{attention_downsample.5} parent=0 // pred_check
    _
  $region3: #{attention_downsample.5} parent=0 // pred_check_branch
    %9 = sbr.rel (0) target = $region5
  $region4: #{attention_downsample.5} parent=0 // pred_region
    _
  $region5: #{attention_downsample.5} parent=0 // pred_fallthru
    _
  // Predicated region
  $region6: #{attention_downsample.5} parent=0 // pred_check
    _
  $region7: #{attention_downsample.5} parent=0 // pred_check_branch
    %11 = sbr.rel (0) target = $region9
  $region8: #{attention_downsample.5} parent=0 // pred_region
    _
  $region9: #{attention_downsample.5} parent=0 // pred_fallthru
    _
  // Predicated region
  $region10: #{attention_downsample.5} parent=0 // pred_check
    _
  $region11: #{attention_downsample.5} parent=0 // pred_check_branch
    %13 = sbr.rel (0) target = $region13
  $region12: #{attention_downsample.5} parent=0 // pred_region
    _
  $region13: #{attention_downsample.5} parent=0 // pred_fallthru
    _
  %v14 = vld [vmem:[%s0] sm:$0xff]
  %v15 = vld [vmem:[%s0 + $0x8] sm:$0xff]
  %v16 = vld [vmem:[%s0 + $0x10] sm:$0xff]
  %v17 = vld [vmem:[%s0 + $0x18] sm:$0xff]
  %v18 = vld [vmem:[%s1] sm:$0x1]
  %v20 = vlaneseq
  %v21 = vshrl.u32 %v20, 7
  %v22 = vsub.s32 0, %v21
  %v23 = vrot.slane %v18, %v22
  %v25 = vmul.f32 %v14, %v23
  %v26 = vmul.f32 %v15, %v23
  %v27 = vmul.f32 %v16, %v23
  %v28 = vmul.f32 %v17, %v23
  %v29 = vld [vmem:[%s2] sm:$0x1]
  %v31 = vlaneseq
  %v32 = vshrl.u32 %v31, 7
  %v33 = vsub.s32 0, %v32
  %v34 = vrot.slane %v29, %v33
  %v36 = vadd.f32 %v25, %v34
  %v37 = vadd.f32 %v26, %v34
  %v38 = vadd.f32 %v27, %v34
  %v39 = vadd.f32 %v28, %v34
  %40 = vst [vmem:[%s3] sm:$0xff] %v36
  %41 = vst [vmem:[%s3 + $0x8] sm:$0xff] %v37
  %42 = vst [vmem:[%s3 + $0x10] sm:$0xff] %v38
  %43 = vst [vmem:[%s3 + $0x18] sm:$0xff] %v39
  // Predicated region
  $region14: #{attention_downsample.5} parent=0 // pred_check
    _
  $region15: #{attention_downsample.5} parent=0 // pred_check_branch
    %45 = sbr.rel (0) target = $region17
  $region16: #{attention_downsample.5} parent=0 // pred_region
    _
  $region17: #{attention_downsample.5} parent=0 // pred_fallthru
    _
  // Predicated region
  $region18: #{attention_downsample.5} parent=0 // pred_check
    _
  $region19: #{attention_downsample.5} parent=0 // pred_check_branch
    %47 = sbr.rel (0) target = $region21
  $region20: #{attention_downsample.5} parent=0 // pred_region
    _
  $region21: #{attention_downsample.5} parent=0 // pred_fallthru
    _

</llo_original>
